<compile_context>
chip_gen: v7x
topology: tpu7x:2x2x1
jax: 0.10.0
libtpu: 0.0.40
codegen_flags: <defaults>
</compile_context>

<pallas_src>
import functools

import jax
import jax.numpy as jnp
from jax.experimental import pallas as pl
from jax.experimental.pallas import tpu as pltpu


def _round_up(n, m):
    return ((n + m - 1) // m) * m


# ----------------------------------------------------------------------------
# Kernel bodies
# ----------------------------------------------------------------------------
def _mlp_body(x_ref, w1_ref, b1_ref, w2_ref, b2_ref, o_ref,
              dropout_bits, keep_thresh, inv_keep):
    """One (TILE_B, ...) batch tile of the fused MLP forward."""
    # ---- Linear(infeat, hidfeat): bf16 operands, f32 accumulate (MXU) ----
    h = jnp.dot(x_ref[...], w1_ref[...], preferred_element_type=jnp.float32)
    h = h + b1_ref[...]                                   # (T, hid) + (1, hid)

    # ---- LeakyReLU (PyTorch default negative_slope = 0.01) ----
    h = jnp.where(h >= 0.0, h, jnp.float32(0.01) * h)

    # ---- Dropout (train mode): integer compare + 1/(1-p) rescale ----
    if dropout_bits is not None:
        keep = dropout_bits >= jnp.int32(keep_thresh)     # P(keep) = 1 - p
        h = jnp.where(keep, h * jnp.float32(inv_keep), jnp.float32(0.0))

    # ---- Linear(hidfeat, outfeat_padded): bf16 operands, f32 accumulate ----
    y = jnp.dot(h.astype(jnp.bfloat16), w2_ref[...],
                preferred_element_type=jnp.float32)
    y = y + b2_ref[...]                                   # (T, out_p) + (1, out_p)

    # ---- Sigmoid (exp on EUP; plain f32 divide for portability) ----
    # TODO(synk): switch the divide to pl.reciprocal(..., approx=True) if the
    # interpret path gains support; it moves the div off the VPU onto the EUP.
    o_ref[...] = jnp.float32(1.0) / (jnp.float32(1.0) + jnp.exp(-y))


def _disc_kernel_train(keep_thresh, inv_keep,
                       x_ref, bits_ref, w1_ref, b1_ref, w2_ref, b2_ref, o_ref):
    _mlp_body(x_ref, w1_ref, b1_ref, w2_ref, b2_ref, o_ref,
              bits_ref[...], keep_thresh, inv_keep)


def _disc_kernel_eval(x_ref, w1_ref, b1_ref, w2_ref, b2_ref, o_ref):
    _mlp_body(x_ref, w1_ref, b1_ref, w2_ref, b2_ref, o_ref, None, None, None)


# ----------------------------------------------------------------------------
# Wrapper
# ----------------------------------------------------------------------------
def _vmem_limit_bytes(tile_b, infeat, hid, out_p):
    # 2x for double buffering of every pipelined ref; generous headroom.
    tiles = 2 * (tile_b * infeat * 2 + tile_b * hid * 4 + tile_b * out_p * 4)
    weights = 2 * (infeat * hid * 2 + hid * 4 + hid * out_p * 2 + out_p * 4)
    total = 2 * (tiles + weights) + (4 << 20)
    return int(min(max(total, 16 << 20), 64 << 20))       # stay within v7x VMEM


def discriminator_forward(x, params, *, dropout, training=True, rng=None):
    """x: (B, infeat) float32.  Returns (B, outfeat) float32."""
    w1, b1, w2, b2 = params
    B, infeat = x.shape
    hid = w1.shape[1]
    outfeat = w2.shape[1]

    # Lane-dense padded output width (>= 128, multiple of 128).
    out_p = _round_up(max(outfeat, 128), 128)
    # Batch tile: multiple of 8 sublanes, capped (multiple of 128 when large).
    tile_b = max(8, min(256, _round_up(B, 8)))
    grid = (pl.cdiv(B, tile_b),)

    # bf16 MXU operands (f32 accumulation inside the kernel); f32 biases.
    xb = x.astype(jnp.bfloat16)
    w1b = w1.astype(jnp.bfloat16)
    w2p = jnp.pad(w2, ((0, 0), (0, out_p - outfeat))).astype(jnp.bfloat16)
    b1f = b1.astype(jnp.float32)
    b2p = jnp.pad(b2, ((0, 0), (0, out_p - outfeat))).astype(jnp.float32)

    x_spec = pl.BlockSpec((tile_b, infeat), lambda i: (i, 0))
    w1_spec = pl.BlockSpec((infeat, hid), lambda i: (0, 0))
    b1_spec = pl.BlockSpec((1, hid), lambda i: (0, 0))
    w2_spec = pl.BlockSpec((hid, out_p), lambda i: (0, 0))
    b2_spec = pl.BlockSpec((1, out_p), lambda i: (0, 0))
    o_spec = pl.BlockSpec((tile_b, out_p), lambda i: (i, 0))

    use_dropout = training and float(dropout) > 0.0
    if use_dropout:
        if rng is None:
            rng = jax.random.PRNGKey(0)
        # 24 random bits per hidden activation, generated host-side (different
        # for every row, so batch tiles never reuse a mask).
        bits = jax.random.bits(rng, (B, hid), dtype=jnp.uint32)
        rand24 = jax.lax.shift_right_logical(bits, jnp.uint32(8)).astype(jnp.int32)
        keep_thresh = int(round(float(dropout) * float(1 << 24)))
        inv_keep = 1.0 / (1.0 - float(dropout))

        kernel = functools.partial(_disc_kernel_train, keep_thresh, inv_keep)
        in_specs = [x_spec,
                    pl.BlockSpec((tile_b, hid), lambda i: (i, 0)),
                    w1_spec, b1_spec, w2_spec, b2_spec]
        args = (xb, rand24, w1b, b1f, w2p, b2p)
    else:
        kernel = _disc_kernel_eval
        in_specs = [x_spec, w1_spec, b1_spec, w2_spec, b2_spec]
        args = (xb, w1b, b1f, w2p, b2p)

    out_padded = pl.pallas_call(
        kernel,
        out_shape=jax.ShapeDtypeStruct((B, out_p), jnp.float32),
        grid=grid,
        in_specs=in_specs,
        out_specs=o_spec,
        compiler_params=pltpu.CompilerParams(
            dimension_semantics=("parallel",),
            vmem_limit_bytes=_vmem_limit_bytes(tile_b, infeat, hid, out_p),
        ),
    )(*args)

    return out_padded[:, :outfeat]


def init_discriminator_params(key, infeat, hidfeat, outfeat):
    """Deterministic init mimicking nn.Linear's U(-1/sqrt(fan_in), 1/sqrt(fan_in))."""
    k1, k2, k3, k4 = jax.random.split(key, 4)
    lim1 = 1.0 / jnp.sqrt(jnp.float32(infeat))
    lim2 = 1.0 / jnp.sqrt(jnp.float32(hidfeat))
    w1 = jax.random.uniform(k1, (infeat, hidfeat), jnp.float32, -lim1, lim1)
    b1 = jax.random.uniform(k2, (1, hidfeat), jnp.float32, -lim1, lim1)
    w2 = jax.random.uniform(k3, (hidfeat, outfeat), jnp.float32, -lim2, lim2)
    b2 = jax.random.uniform(k4, (1, outfeat), jnp.float32, -lim2, lim2)
    return w1, b1, w2, b2


if __name__ == "__main__":
    # Small shapes consistent with the module's forward: x is (batch, infeat).
    B, INFEAT, HIDFEAT, OUTFEAT = 8, 32, 64, 8
    DROPOUT = 0.2

    key = jax.random.PRNGKey(0)
    kx, kp, kd = jax.random.split(key, 3)
    x = jax.random.normal(kx, (B, INFEAT), dtype=jnp.float32)
    params = init_discriminator_params(kp, INFEAT, HIDFEAT, OUTFEAT)

    out = discriminator_forward(x, params, dropout=DROPOUT, training=True, rng=kd)
    out = jax.block_until_ready(out)

    assert out.shape == (B, OUTFEAT)
    assert bool(jnp.all((out >= 0.0) & (out <= 1.0)))   # sigmoid range sanity check

    # Eval-mode path (no dropout) also runs.
    out_eval = jax.block_until_ready(
        discriminator_forward(x, params, dropout=DROPOUT, training=False))
    assert out_eval.shape == (B, OUTFEAT)

    print("KERNEL_OK")
</pallas_src>

<mosaic_0001>
module attributes {stable_mosaic.version = 11 : i64} {
  func.func @_disc_kernel_train(%arg0: i32, %arg1: memref<8x32xbf16, #tpu.memory_space<vmem>>, %arg2: memref<8x64xi32, #tpu.memory_space<vmem>>, %arg3: memref<32x64xbf16, #tpu.memory_space<vmem>>, %arg4: memref<1x64xf32, #tpu.memory_space<vmem>>, %arg5: memref<64x128xbf16, #tpu.memory_space<vmem>>, %arg6: memref<1x128xf32, #tpu.memory_space<vmem>>, %arg7: memref<8x128xf32, #tpu.memory_space<vmem>>) attributes {dimension_semantics = [#tpu.dimension_semantics<parallel>], iteration_bounds = array<i64: 1>, scalar_prefetch = 0 : i64, scratch_operands = 0 : i64, tpu.core_type = #tpu.core_type<tc>, window_params = [{transform_indices = @transform_0, window_bounds = array<i64: 8, 32>}, {transform_indices = @transform_1, window_bounds = array<i64: 8, 64>}, {pipeline_mode = #tpu.pipeline_mode<synchronous>, transform_indices = @transform_2, window_bounds = array<i64: 32, 64>}, {pipeline_mode = #tpu.pipeline_mode<synchronous>, transform_indices = @transform_3, window_bounds = array<i64: 1, 64>}, {pipeline_mode = #tpu.pipeline_mode<synchronous>, transform_indices = @transform_4, window_bounds = array<i64: 64, 128>}, {pipeline_mode = #tpu.pipeline_mode<synchronous>, transform_indices = @transform_5, window_bounds = array<i64: 1, 128>}, {transform_indices = @transform_6, window_bounds = array<i64: 8, 128>}]} {
    %c0 = arith.constant 0 : index
    %c0_0 = arith.constant 0 : index
    %0 = vector.load %arg2[%c0, %c0_0] : memref<8x64xi32, #tpu.memory_space<vmem>>, vector<8x64xi32>
    %c0_1 = arith.constant 0 : index
    %c0_2 = arith.constant 0 : index
    %1 = vector.load %arg1[%c0_1, %c0_2] : memref<8x32xbf16, #tpu.memory_space<vmem>>, vector<8x32xbf16>
    %c0_3 = arith.constant 0 : index
    %c0_4 = arith.constant 0 : index
    %2 = vector.load %arg3[%c0_3, %c0_4] : memref<32x64xbf16, #tpu.memory_space<vmem>>, vector<32x64xbf16>
    %cst = arith.constant dense<0.000000e+00> : vector<8x64xf32>
    %3 = tpu.matmul %1, %2, %cst {dimension_numbers = #tpu.dot_dimension_numbers<[1], [0], [0], [1], [0, 0, 1, 1], [], []>} : vector<8x32xbf16>, vector<32x64xbf16>, vector<8x64xf32> -> vector<8x64xf32>
    %c0_5 = arith.constant 0 : index
    %c0_6 = arith.constant 0 : index
    %4 = vector.load %arg4[%c0_5, %c0_6] : memref<1x64xf32, #tpu.memory_space<vmem>>, vector<1x64xf32>
    %5 = vector.broadcast %4 : vector<1x64xf32> to vector<8x64xf32>
    %6 = arith.addf %3, %5 : vector<8x64xf32>
    %cst_7 = arith.constant 0.000000e+00 : f32
    %7 = vector.broadcast %cst_7 : f32 to vector<8x64xf32>
    %8 = arith.cmpf oge, %6, %7 : vector<8x64xf32>
    %cst_8 = arith.constant 0.00999999977 : f32
    %9 = vector.broadcast %cst_8 : f32 to vector<8x64xf32>
    %10 = arith.mulf %9, %6 : vector<8x64xf32>
    %11 = arith.select %8, %6, %10 : vector<8x64xi1>, vector<8x64xf32>
    %c3355443_i32 = arith.constant 3355443 : i32
    %12 = vector.broadcast %c3355443_i32 : i32 to vector<8x64xi32>
    %13 = arith.cmpi sge, %0, %12 : vector<8x64xi32>
    %cst_9 = arith.constant 1.250000e+00 : f32
    %14 = vector.broadcast %cst_9 : f32 to vector<8x64xf32>
    %15 = arith.mulf %11, %14 : vector<8x64xf32>
    %cst_10 = arith.constant 0.000000e+00 : f32
    %16 = vector.broadcast %cst_10 : f32 to vector<8x64xf32>
    %17 = arith.select %13, %15, %16 : vector<8x64xi1>, vector<8x64xf32>
    %18 = arith.truncf %17 : vector<8x64xf32> to vector<8x64xbf16>
    %c0_11 = arith.constant 0 : index
    %c0_12 = arith.constant 0 : index
    %19 = vector.load %arg5[%c0_11, %c0_12] : memref<64x128xbf16, #tpu.memory_space<vmem>>, vector<64x128xbf16>
    %cst_13 = arith.constant dense<0.000000e+00> : vector<8x128xf32>
    %20 = tpu.matmul %18, %19, %cst_13 {dimension_numbers = #tpu.dot_dimension_numbers<[1], [0], [0], [1], [0, 0, 1, 1], [], []>} : vector<8x64xbf16>, vector<64x128xbf16>, vector<8x128xf32> -> vector<8x128xf32>
    %c0_14 = arith.constant 0 : index
    %c0_15 = arith.constant 0 : index
    %21 = vector.load %arg6[%c0_14, %c0_15] : memref<1x128xf32, #tpu.memory_space<vmem>>, vector<1x128xf32>
    %22 = vector.broadcast %21 : vector<1x128xf32> to vector<8x128xf32>
    %23 = arith.addf %20, %22 : vector<8x128xf32>
    %cst_16 = arith.constant 0.000000e+00 : f32
    %24 = vector.broadcast %cst_16 : f32 to vector<8x128xf32>
    %25 = arith.subf %24, %23 : vector<8x128xf32>
    %26 = math.exp %25 : vector<8x128xf32>
    %cst_17 = arith.constant 1.000000e+00 : f32
    %27 = vector.broadcast %cst_17 : f32 to vector<8x128xf32>
    %28 = arith.addf %27, %26 : vector<8x128xf32>
    %cst_18 = arith.constant 1.000000e+00 : f32
    %29 = vector.broadcast %cst_18 : f32 to vector<8x128xf32>
    %30 = arith.divf %29, %28 : vector<8x128xf32>
    %c0_19 = arith.constant 0 : index
    %c0_20 = arith.constant 0 : index
    %31 = vector.load %arg7[%c0_19, %c0_20] : memref<8x128xf32, #tpu.memory_space<vmem>>, vector<8x128xf32>
    tpu.vector_store %arg7[%c0_19, %c0_20], %30 {strides = array<i32>} : memref<8x128xf32, #tpu.memory_space<vmem>>, vector<8x128xf32>,
    return
  }
  func.func @transform_0(%arg0: i32) -> (i32, i32) {
    %c0_i32 = arith.constant 0 : i32
    %c0_i32_0 = arith.constant 0 : i32
    return %arg0, %c0_i32 : i32, i32
  }
  func.func @transform_1(%arg0: i32) -> (i32, i32) {
    %c0_i32 = arith.constant 0 : i32
    %c0_i32_0 = arith.constant 0 : i32
    return %arg0, %c0_i32 : i32, i32
  }
  func.func @transform_2(%arg0: i32) -> (i32, i32) {
    %c0_i32 = arith.constant 0 : i32
    %c0_i32_0 = arith.constant 0 : i32
    %c0_i32_1 = arith.constant 0 : i32
    return %c0_i32, %c0_i32_0 : i32, i32
  }
  func.func @transform_3(%arg0: i32) -> (i32, i32) {
    %c0_i32 = arith.constant 0 : i32
    %c0_i32_0 = arith.constant 0 : i32
    %c0_i32_1 = arith.constant 0 : i32
    return %c0_i32, %c0_i32_0 : i32, i32
  }
  func.func @transform_4(%arg0: i32) -> (i32, i32) {
    %c0_i32 = arith.constant 0 : i32
    %c0_i32_0 = arith.constant 0 : i32
    %c0_i32_1 = arith.constant 0 : i32
    return %c0_i32, %c0_i32_0 : i32, i32
  }
  func.func @transform_5(%arg0: i32) -> (i32, i32) {
    %c0_i32 = arith.constant 0 : i32
    %c0_i32_0 = arith.constant 0 : i32
    %c0_i32_1 = arith.constant 0 : i32
    return %c0_i32, %c0_i32_0 : i32, i32
  }
  func.func @transform_6(%arg0: i32) -> (i32, i32) {
    %c0_i32 = arith.constant 0 : i32
    %c0_i32_0 = arith.constant 0 : i32
    return %arg0, %c0_i32 : i32, i32
  }
}

</mosaic_0001>

<llo_original>
// kernel: tpu_custom_call.1
$region0: #{tpu_custom_call.1}
  #allocation0 [shape = 'u32[]', space=smem, size = 0x4, offset = 0x4, fixed_abs, tag = 'smem constant byte address 0x4 - core index']
  #allocation1 [shape = 'u32[144,128]{1,0:T(1,128)}', space=vmem, size = 0x12000, scoped, tag = 'internal scratch']
  %s0 = inlined_call_operand.hbm [shape: bf16[8,32], index: 0, kind: input, shape index: {}]
  %s1 = inlined_call_operand.hbm [shape: s32[8,64], index: 1, kind: input, shape index: {}]
  %s2 = inlined_call_operand.hbm [shape: bf16[32,64], index: 2, kind: input, shape index: {}]
  %s3 = inlined_call_operand.vmem [shape: f32[1,64], index: 3, kind: input, shape index: {}]
  %s4 = inlined_call_operand.hbm [shape: bf16[64,128], index: 4, kind: input, shape index: {}]
  %s5 = inlined_call_operand.vmem [shape: f32[1,128], index: 5, kind: input, shape index: {}]
  %s6 = inlined_call_operand.hbm [shape: f32[8,128], index: 6, kind: output, shape index: {}]
  %s7 = sld [smem:[#allocation0]]
  $region50: #{tpu_custom_call.1} parent=0
    _
  %s9 = ssub.s32 1, %s7
  %s10 = scalar_select 0, %s9, %s7
  $region1: #{tpu_custom_call.1} parent=0
    #allocation2 [shape = 'u8[2048]{0}', space=vmem, size = 0x800, scoped, tag = 'input window, operand 0, single buffered']
    #allocation3 [shape = 's32[1]{0}', space=sflag, size = 0x4, scoped, tag = 'scoped memory for tpu_custom_call.1']
    #allocation4 [shape = 's32[1]{0}', space=sflag, size = 0x4, scoped, tag = 'scoped memory for tpu_custom_call.1']
    #allocation5 [shape = 'u8[4096]{0}', space=vmem, size = 0x1000, scoped, tag = 'input window, operand 1, single buffered']
    #allocation6 [shape = 's32[1]{0}', space=sflag, size = 0x4, scoped, tag = 'scoped memory for tpu_custom_call.1']
    #allocation7 [shape = 'u8[8192]{0}', space=vmem, size = 0x2000, scoped, tag = 'input window, operand 2, single buffered']
    #allocation8 [shape = 'u8[16384]{0}', space=vmem, size = 0x4000, scoped, tag = 'input window, operand 4, single buffered']
    #allocation9 [shape = 's32[1]{0}', space=sflag, size = 0x4, scoped, tag = 'scoped memory for tpu_custom_call.1']
    #allocation10 [shape = 'u8[4096]{0}', space=vmem, size = 0x1000, scoped, tag = 'output window, operand 0, single buffered']
    %11 = vsyncpa [#allocation3], 0
    %12 = vsyncpa [#allocation6], 0
    %13 = vsyncpa [#allocation9], 0
    %14 = vsyncpa [#allocation4], 0
    // Predicated region
    $region2: #{tpu_custom_call.1} parent=1 // pred_check
      _
    $region3: #{tpu_custom_call.1} parent=1 // pred_check_branch
      %16 = sbr.rel (0) target = $region5
    $region4: #{tpu_custom_call.1} parent=1 // pred_region
      %s18 = ssub.s32 64, 64
      %19 = vsyncadd [#allocation3], %s18
      %s21 = sshll.u32 [#allocation2], 4
      %s22 = int_to_ptr.vmem [resolvable:$true] %s21
      %24 = dma.hbm_to_vmem [thread:$0]  %s0, 64, %s22, [#allocation3]
    $region5: #{tpu_custom_call.1} parent=1 // pred_fallthru
      _
    // Predicated region
    $region6: #{tpu_custom_call.1} parent=1 // pred_check
      _
    $region7: #{tpu_custom_call.1} parent=1 // pred_check_branch
      %26 = sbr.rel (0) target = $region9
    $region8: #{tpu_custom_call.1} parent=1 // pred_region
      %s28 = ssub.s32 128, 128
      %29 = vsyncadd [#allocation6], %s28
      %s31 = sshll.u32 [#allocation5], 4
      %s32 = int_to_ptr.vmem [resolvable:$true] %s31
      %34 = dma.hbm_to_vmem [thread:$0]  %s1, 128, %s32, [#allocation6]
    $region9: #{tpu_custom_call.1} parent=1 // pred_fallthru
      _
    // Predicated region
    $region10: #{tpu_custom_call.1} parent=1 // pred_check
      _
    $region11: #{tpu_custom_call.1} parent=1 // pred_check_branch
      %36 = sbr.rel (0) target = $region13
    $region12: #{tpu_custom_call.1} parent=1 // pred_region
      %s38 = ssub.s32 256, 256
      %39 = vsyncadd [#allocation6], %s38
      %s40 = sshll.u32 [#allocation7], 4
      %s41 = int_to_ptr.vmem [resolvable:$true] %s40
      %46 = dma.hbm_to_vmem [thread:$0]  %s2, 256, %s41, [#allocation6], 64, 64, 4
    $region13: #{tpu_custom_call.1} parent=1 // pred_fallthru
      _
    // Predicated region
    $region14: #{tpu_custom_call.1} parent=1 // pred_check
      _
    $region15: #{tpu_custom_call.1} parent=1 // pred_check_branch
      %48 = sbr.rel (0) target = $region17
    $region16: #{tpu_custom_call.1} parent=1 // pred_region
      _
    $region17: #{tpu_custom_call.1} parent=1 // pred_fallthru
      _
    // Predicated region
    $region18: #{tpu_custom_call.1} parent=1 // pred_check
      _
    $region19: #{tpu_custom_call.1} parent=1 // pred_check_branch
      %50 = sbr.rel (0) target = $region21
    $region20: #{tpu_custom_call.1} parent=1 // pred_region
      %s52 = ssub.s32 512, 512
      %53 = vsyncadd [#allocation9], %s52
      %s54 = sshll.u32 [#allocation8], 4
      %s55 = int_to_ptr.vmem [resolvable:$true] %s54
      %60 = dma.hbm_to_vmem [thread:$0]  %s4, 512, %s55, [#allocation9], 64, 64, 4
    $region21: #{tpu_custom_call.1} parent=1 // pred_fallthru
      _
    // Predicated region
    $region22: #{tpu_custom_call.1} parent=1 // pred_check
      _
    $region23: #{tpu_custom_call.1} parent=1 // pred_check_branch
      %62 = sbr.rel (0) target = $region25
    $region24: #{tpu_custom_call.1} parent=1 // pred_region
      _
    $region25: #{tpu_custom_call.1} parent=1 // pred_fallthru
      _
    // Predicated region
    $region26: #{tpu_custom_call.1} parent=1 // pred_check
      _
    $region27: #{tpu_custom_call.1} parent=1 // pred_check_branch
      %64 = sbr.rel (0) target = $region29
    $region28: #{tpu_custom_call.1} parent=1 // pred_region
      %65 = dma.done [#allocation3], 64
    $region29: #{tpu_custom_call.1} parent=1 // pred_fallthru
      _
    // Predicated region
    $region30: #{tpu_custom_call.1} parent=1 // pred_check
      _
    $region31: #{tpu_custom_call.1} parent=1 // pred_check_branch
      %67 = sbr.rel (0) target = $region33
    $region32: #{tpu_custom_call.1} parent=1 // pred_region
      %68 = dma.done [#allocation6], 128
    $region33: #{tpu_custom_call.1} parent=1 // pred_fallthru
      _
    // Predicated region
    $region34: #{tpu_custom_call.1} parent=1 // pred_check
      _
    $region35: #{tpu_custom_call.1} parent=1 // pred_check_branch
      %70 = sbr.rel (0) target = $region37
    $region36: #{tpu_custom_call.1} parent=1 // pred_region
      %71 = dma.done [#allocation6], 256
    $region37: #{tpu_custom_call.1} parent=1 // pred_fallthru
      _
    // Predicated region
    $region38: #{tpu_custom_call.1} parent=1 // pred_check
      _
    $region39: #{tpu_custom_call.1} parent=1 // pred_check_branch
      %73 = sbr.rel (0) target = $region41
    $region40: #{tpu_custom_call.1} parent=1 // pred_region
      %74 = dma.done [#allocation9], 512
    $region41: #{tpu_custom_call.1} parent=1 // pred_fallthru
      _
    %v76 = vld [vmem:[#allocation5] sm:$0xff]
    %v77 = vld [vmem:[#allocation2] sm:$0xf]
    %v78 = vld [vmem:[#allocation7] sm:$0xf]
    %v79 = vld [vmem:[#allocation7 + $0x4] sm:$0xf]
    %v80 = vld [vmem:[#allocation7 + $0x8] sm:$0xf]
    %v81 = vld [vmem:[#allocation7 + $0xc] sm:$0xf]
    %v82 = vld [vmem:[%s3] sm:$0x1]
    %v84 = vlaneseq
    %v85 = vshrl.u32 %v84, 7
    %v86 = vsub.s32 0, %v85
    %v87 = vrot.slane %v82, %v86
    %v93 = vunpack.c.l.b16 %v78
    %v94 = vunpack.c.l.b16 %v79
    %v95 = vunpack.c.l.b16 %v80
    %v96 = vunpack.c.l.b16 %v81
    %v97 = vpack.c.b16 %v94, %v93
    %v98 = vpack.c.b16 %v96, %v95
    %vm101 = vcmask 261120
    %v103 = vsel %vm101, %v77, 0
    %105 = vmatprep.subr.bf16.mxu0 0
    %106 = vmatpush1.bf16.msra.mxu0 %v97
    %107 = vmatprep.subr.bf16.mxu0 0
    %108 = vmatpush1.bf16.msra.mxu0 %v98
    %109 = vmatprep.subr.bf16.mxu0 0
    %110 = vmatpush1.bf16.msra.mxu0 0
    %111 = vmatprep.subr.bf16.mxu0 0
    %112 = vmatpush1.bf16.msra.mxu0 0
    %113 = vmatprep.subr.bf16.mxu0 0
    %114 = vmatpush1.bf16.msra.mxu0 0
    %115 = vmatprep.subr.bf16.mxu0 0
    %116 = vmatpush1.bf16.msra.mxu0 0
    %117 = vmatprep.subr.bf16.mxu0 0
    %118 = vmatpush1.bf16.msra.mxu0 0
    %119 = vmatprep.subr.bf16.mxu0 0
    %120 = vmatpush1.bf16.msra.mxu0 0
    %121 = vmatprep.subr.bf16.mxu0 0
    %122 = vmatpush1.bf16.msra.mxu0 0
    %123 = vmatprep.subr.bf16.mxu0 0
    %124 = vmatpush1.bf16.msra.mxu0 0
    %125 = vmatprep.subr.bf16.mxu0 0
    %126 = vmatpush1.bf16.msra.mxu0 0
    %127 = vmatprep.subr.bf16.mxu0 0
    %128 = vmatpush1.bf16.msra.mxu0 0
    %129 = vmatprep.subr.bf16.mxu0 0
    %130 = vmatpush1.bf16.msra.mxu0 0
    %131 = vmatprep.subr.bf16.mxu0 0
    %132 = vmatpush1.bf16.msra.mxu0 0
    %133 = vmatprep.subr.bf16.mxu0 0
    %134 = vmatpush1.bf16.msra.mxu0 0
    %135 = vmatprep.subr.bf16.mxu0 0
    %136 = vmatpush1.bf16.msra.mxu0 0
    %137 = vmatprep.mubr.bf16.mxu0 0
    %138 = vmatmul.mubr.bf16.gmra.mrb[0].mxu0 %v103
    %v139 = vpop.f32.mrb[0].mxu0
    %v140 = vadd.f32 %v87, %v139
    %v141 = vpop.f32.mrb[0].mxu0
    %v142 = vpop.f32.mrb[0].mxu0
    %v143 = vpop.f32.mrb[0].mxu0
    %144 = vdwg.mxu0
    %vm145 = vcmp.ge.f32.partialorder %v140, 0.0
    %v146 = vmul.f32 %v140, 0.01
    %v147 = vsel %vm145, %v140, %v146
    %vm148 = vcmp.ge.s32.totalorder %v76, 3355443
    %v149 = vmul.f32 %v147, 1.25
    %v150 = vsel %vm148, %v149, 0.0
    %v151 = vpack.c.bf16 %v150, %v150
    %v152 = vld [vmem:[#allocation8] sm:$0xf]
    %v153 = vld [vmem:[#allocation8 + $0x4] sm:$0xf]
    %v154 = vld [vmem:[#allocation8 + $0x8] sm:$0xf]
    %v155 = vld [vmem:[#allocation8 + $0xc] sm:$0xf]
    %v156 = vld [vmem:[#allocation8 + $0x10] sm:$0xf]
    %v157 = vld [vmem:[#allocation8 + $0x14] sm:$0xf]
    %v158 = vld [vmem:[#allocation8 + $0x18] sm:$0xf]
    %v159 = vld [vmem:[#allocation8 + $0x1c] sm:$0xf]
    %v160 = vld [vmem:[%s5] sm:$0x1]
    %v162 = vlaneseq
    %v163 = vshrl.u32 %v162, 7
    %v164 = vsub.s32 0, %v163
    %v165 = vrot.slane %v160, %v164
    %v175 = vunpack.c.l.b16 %v152
    %v176 = vunpack.c.l.b16 %v153
    %v177 = vunpack.c.l.b16 %v154
    %v178 = vunpack.c.l.b16 %v155
    %v179 = vunpack.c.l.b16 %v156
    %v180 = vunpack.c.l.b16 %v157
    %v181 = vunpack.c.l.b16 %v158
    %v182 = vunpack.c.l.b16 %v159
    %v183 = vpack.c.b16 %v176, %v175
    %v184 = vpack.c.b16 %v178, %v177
    %v185 = vpack.c.b16 %v180, %v179
    %v186 = vpack.c.b16 %v182, %v181
    %vm191 = vcmask 523264
    %v193 = vsel %vm191, %v151, 0
    %195 = vmatprep.subr.bf16.mxu0 0
    %196 = vmatpush1.bf16.msra.mxu0 %v183
    %197 = vmatprep.subr.bf16.mxu0 0
    %198 = vmatpush1.bf16.msra.mxu0 %v184
    %199 = vmatprep.subr.bf16.mxu0 0
    %200 = vmatpush1.bf16.msra.mxu0 %v185
    %201 = vmatprep.subr.bf16.mxu0 0
    %202 = vmatpush1.bf16.msra.mxu0 %v186
    %203 = vmatprep.subr.bf16.mxu0 0
    %204 = vmatpush1.bf16.msra.mxu0 0
    %205 = vmatprep.subr.bf16.mxu0 0
    %206 = vmatpush1.bf16.msra.mxu0 0
    %207 = vmatprep.subr.bf16.mxu0 0
    %208 = vmatpush1.bf16.msra.mxu0 0
    %209 = vmatprep.subr.bf16.mxu0 0
    %210 = vmatpush1.bf16.msra.mxu0 0
    %211 = vmatprep.subr.bf16.mxu0 0
    %212 = vmatpush1.bf16.msra.mxu0 0
    %213 = vmatprep.subr.bf16.mxu0 0
    %214 = vmatpush1.bf16.msra.mxu0 0
    %215 = vmatprep.subr.bf16.mxu0 0
    %216 = vmatpush1.bf16.msra.mxu0 0
    %217 = vmatprep.subr.bf16.mxu0 0
    %218 = vmatpush1.bf16.msra.mxu0 0
    %219 = vmatprep.subr.bf16.mxu0 0
    %220 = vmatpush1.bf16.msra.mxu0 0
    %221 = vmatprep.subr.bf16.mxu0 0
    %222 = vmatpush1.bf16.msra.mxu0 0
    %223 = vmatprep.subr.bf16.mxu0 0
    %224 = vmatpush1.bf16.msra.mxu0 0
    %225 = vmatprep.subr.bf16.mxu0 0
    %226 = vmatpush1.bf16.msra.mxu0 0
    %227 = vmatprep.mubr.bf16.mxu0 0
    %228 = vmatmul.mubr.bf16.gmra.mrb[0].mxu0 %v193
    %v229 = vpop.f32.mrb[0].mxu0
    %v230 = vadd.f32 %v165, %v229
    %v231 = vpop.f32.mrb[0].mxu0
    %v232 = vpop.f32.mrb[0].mxu0
    %v233 = vpop.f32.mrb[0].mxu0
    %234 = vdwg.mxu0
    %v235 = vsub.f32 0.0, %v230
    %v236 = vmul.f32 %v235, 1.442695
    %v237 = vpow.pop %v236
    %v238 = vadd.f32 %v237, 1.0
    %v239 = vrcp.pop %v238
    %v240 = vmul.f32 1.0, %v239
    %241 = vst [vmem:[#allocation10] sm:$0xff] %v240
    // Predicated region
    $region42: #{tpu_custom_call.1} parent=1 // pred_check
      _
    $region43: #{tpu_custom_call.1} parent=1 // pred_check_branch
      %243 = sbr.rel (0) target = $region45
    $region44: #{tpu_custom_call.1} parent=1 // pred_region
      %s245 = ssub.s32 128, 128
      %246 = vsyncadd [#allocation4], %s245
      %s248 = sshll.u32 [#allocation10], 4
      %s249 = int_to_ptr.vmem [resolvable:$true] %s248
      %251 = dma.vmem_to_hbm [thread:$0]  %s249, 128, %s6, [#allocation4]
    $region45: #{tpu_custom_call.1} parent=1 // pred_fallthru
      _
    // Predicated region
    $region46: #{tpu_custom_call.1} parent=1 // pred_check
      _
    $region47: #{tpu_custom_call.1} parent=1 // pred_check_branch
      %253 = sbr.rel (0) target = $region49
    $region48: #{tpu_custom_call.1} parent=1 // pred_region
      %254 = dma.done [#allocation4], 128
    $region49: #{tpu_custom_call.1} parent=1 // pred_fallthru
      _
    %255 = vsyncpa [#allocation3], 1
    %256 = vsyncpa [#allocation6], 1
    %257 = vsyncpa [#allocation9], 1
    %258 = vsyncpa [#allocation4], 1

</llo_original>
